<compile_context>
chip_gen: v7x
topology: tpu7x:2x2x1
jax: 0.10.0
libtpu: 0.0.40
codegen_flags: <defaults>
</compile_context>

<pallas_src>
import functools

import jax
import jax.numpy as jnp
from jax import lax
from jax.experimental import pallas as pl
from jax.experimental.pallas import tpu as pltpu


def _pick_tile(n, target, mult=8):
    """Largest multiple of `mult` that divides n and is <= target (fallback: n)."""
    target = min(target, n)
    best = None
    t = mult
    while t <= target:
        if n % t == 0:
            best = t
        t += mult
    return best if best is not None else n


# -----------------------------------------------------------------------------
# Linear: y = x @ W + b, tiled over rows (tokens), "parallel" for megacore/2-TC.
# -----------------------------------------------------------------------------
def _linear_kernel(x_ref, w_ref, b_ref, o_ref, *, compute_dtype):
    x = x_ref[...].astype(compute_dtype)          # MXU inputs (bf16 on v6e/v7x)
    w = w_ref[...].astype(compute_dtype)
    acc = jnp.dot(x, w, preferred_element_type=jnp.float32)  # f32 accumulation
    o_ref[...] = (acc + b_ref[...].astype(jnp.float32)).astype(o_ref.dtype)


def pallas_linear(x2d, w, b, *, tm=512, compute_dtype=jnp.float32):
    M, Cin = x2d.shape
    Cout = w.shape[1]
    tm = _pick_tile(M, tm)
    kernel = functools.partial(_linear_kernel, compute_dtype=compute_dtype)
    return pl.pallas_call(
        kernel,
        out_shape=jax.ShapeDtypeStruct((M, Cout), x2d.dtype),
        grid=(M // tm,),
        in_specs=[
            pl.BlockSpec((tm, Cin), lambda i: (i, 0)),
            pl.BlockSpec((Cin, Cout), lambda i: (0, 0)),   # weights replicated
            pl.BlockSpec((1, Cout), lambda i: (0, 0)),
        ],
        out_specs=pl.BlockSpec((tm, Cout), lambda i: (i, 0)),
        compiler_params=pltpu.CompilerParams(dimension_semantics=("parallel",)),
    )(x2d, w, b)


# -----------------------------------------------------------------------------
# Flash attention (online softmax over KV tiles).
#
# Per-step VMEM is O(tq*C + tk*2C + nhead*tq*tk) — independent of the sequence
# lengths — so default tq=tk=256 stays well inside the 32 MiB scoped VMEM
# default on every generation (incl. v7x's 64 MiB physical).
# -----------------------------------------------------------------------------
def _attn_kernel(q_ref, kv_ref, o_ref, m_ref, l_ref, acc_ref,
                 *, nhead, compute_dtype):
    j = pl.program_id(2)                       # KV-tile (reduction) axis, last

    @pl.when(j == 0)
    def _():
        m_ref[...] = jnp.full_like(m_ref, -jnp.inf)
        l_ref[...] = jnp.zeros_like(l_ref)
        acc_ref[...] = jnp.zeros_like(acc_ref)

    _, tq, C = q_ref.shape
    tk = kv_ref.shape[1]
    D = C // nhead

    # Lane-dense loads/stores in packed-head token layout (last dim = C / 2C);
    # heads are split only inside VMEM.
    q = q_ref[0]                               # (tq, C)   (scale already folded)
    kv = kv_ref[0]                             # (tk, 2C)  fused K|V projection
    k = kv[:, :C]
    v = kv[:, C:]

    qh = jnp.transpose(q.reshape(tq, nhead, D), (1, 0, 2)).astype(compute_dtype)
    kh = jnp.transpose(k.reshape(tk, nhead, D), (1, 0, 2)).astype(compute_dtype)
    vh = jnp.transpose(v.reshape(tk, nhead, D), (1, 0, 2)).astype(compute_dtype)

    # s[h, q, k] — contract the last dims directly, no explicit K transpose.
    s = lax.dot_general(qh, kh, (((2,), (2,)), ((0,), (0,))),
                        preferred_element_type=jnp.float32)       # (h, tq, tk)

    m_prev = m_ref[...]                                           # (h, tq, 1)
    m_new = jnp.maximum(m_prev, jnp.max(s, axis=-1, keepdims=True))
    alpha = jnp.exp(m_prev - m_new)
    p = jnp.exp(s - m_new)                                        # f32 softmax
    l_ref[...] = alpha * l_ref[...] + jnp.sum(p, axis=-1, keepdims=True)
    pv = lax.dot_general(p.astype(compute_dtype), vh,
                         (((2,), (1,)), ((0,), (0,))),
                         preferred_element_type=jnp.float32)      # (h, tq, D)
    acc_ref[...] = alpha * acc_ref[...] + pv
    m_ref[...] = m_new

    @pl.when(j == pl.num_programs(2) - 1)
    def _():
        inv_l = pl.reciprocal(l_ref[...], approx=True)            # EUP slot
        out = acc_ref[...] * inv_l                                # (h, tq, D)
        o_ref[0] = jnp.transpose(out, (1, 0, 2)).reshape(tq, C).astype(o_ref.dtype)


def pallas_attention(q, kvp, nhead, *, tq=256, tk=256, compute_dtype=jnp.float32):
    # q: (B, N, C) packed heads; kvp: (B, M, 2C) fused K|V projection output.
    B, N, C = q.shape
    M = kvp.shape[1]
    assert kvp.shape[2] == 2 * C and C % nhead == 0
    tq = _pick_tile(N, tq)
    tk = _pick_tile(M, tk)
    D = C // nhead
    kernel = functools.partial(_attn_kernel, nhead=nhead,
                               compute_dtype=compute_dtype)
    return pl.pallas_call(
        kernel,
        out_shape=jax.ShapeDtypeStruct((B, N, C), q.dtype),
        grid=(B, N // tq, M // tk),            # reduction (KV) axis last
        in_specs=[
            pl.BlockSpec((1, tq, C), lambda b, i, j: (b, i, 0)),
            pl.BlockSpec((1, tk, 2 * C), lambda b, i, j: (b, j, 0)),
        ],
        out_specs=pl.BlockSpec((1, tq, C), lambda b, i, j: (b, i, 0)),
        scratch_shapes=[
            pltpu.VMEM((nhead, tq, 1), jnp.float32),   # running max
            pltpu.VMEM((nhead, tq, 1), jnp.float32),   # running sum
            pltpu.VMEM((nhead, tq, D), jnp.float32),   # output accumulator
        ],
        compiler_params=pltpu.CompilerParams(
            dimension_semantics=("parallel", "parallel", "arbitrary")),
    )(q, kvp)


# -----------------------------------------------------------------------------
# Module forward (glue in plain JAX, matmuls / softmax in Pallas)
# -----------------------------------------------------------------------------
def flash_attention_2d(x, kv, params, nhead, self_attn=False, *,
                       tq=256, tk=256, tm=512, compute_dtype=jnp.float32):
    Wq, bq, Wk, bk, Wv, bv, Wo, bo = params
    B, C, Hs, Ws = x.shape
    N = Hs * Ws
    D = C // nhead
    scale = float(D) ** (-0.5)

    # x.view(B, C, -1).permute(0, 2, 1) -> (B, N, C)  (required by the module)
    x_tok = jnp.transpose(x.reshape(B, C, N), (0, 2, 1))
    if self_attn:
        kv = jnp.concatenate([x_tok, kv], axis=1)
    M = kv.shape[1]

    # Fold the softmax scale into the Q projection parameters (zero runtime cost).
    Wq_s, bq_s = Wq * scale, bq * scale
    # Fuse the K and V projections into a single (C, 2C) matmul over kv.
    Wkv = jnp.concatenate([Wk, Wv], axis=1)
    bkv = jnp.concatenate([bk, bv], axis=1)

    q = pallas_linear(x_tok.reshape(B * N, C), Wq_s, bq_s,
                      tm=tm, compute_dtype=compute_dtype).reshape(B, N, C)
    kvp = pallas_linear(kv.reshape(B * M, C), Wkv, bkv,
                        tm=tm, compute_dtype=compute_dtype).reshape(B, M, 2 * C)

    # Attention consumes/produces packed-head token layout directly — the head
    # split/merge transposes of the original wrapper are gone.
    o = pallas_attention(q, kvp, nhead, tq=tq, tk=tk, compute_dtype=compute_dtype)

    o = pallas_linear(o.reshape(B * N, C), Wo, bo,
                      tm=tm, compute_dtype=compute_dtype).reshape(B, N, C)

    # permute back to NCHW
    return jnp.transpose(o, (0, 2, 1)).reshape(B, C, Hs, Ws)


# -----------------------------------------------------------------------------
# Pure-JAX reference (for correctness check)
# -----------------------------------------------------------------------------
def reference(x, kv, params, nhead, self_attn=False):
    Wq, bq, Wk, bk, Wv, bv, Wo, bo = params
    B, C, Hs, Ws = x.shape
    N = Hs * Ws
    D = C // nhead
    scale = float(D) ** (-0.5)
    x_tok = jnp.transpose(x.reshape(B, C, N), (0, 2, 1))
    if self_attn:
        kv = jnp.concatenate([x_tok, kv], axis=1)
    M = kv.shape[1]
    q = (x_tok @ Wq + bq).reshape(B, N, nhead, D)
    k = (kv @ Wk + bk).reshape(B, M, nhead, D)
    v = (kv @ Wv + bv).reshape(B, M, nhead, D)
    s = jnp.einsum("bnhd,bmhd->bhnm", q, k) * scale
    p = jax.nn.softmax(s, axis=-1)
    o = jnp.einsum("bhnm,bmhd->bnhd", p, v).reshape(B, N, C)
    o = o @ Wo + bo
    return jnp.transpose(o, (0, 2, 1)).reshape(B, C, Hs, Ws)


# -----------------------------------------------------------------------------
# Deterministic parameter init (shapes from Attention.__init__: 4x Linear(c, c))
# -----------------------------------------------------------------------------
def init_linear(key, c):
    kw, kb = jax.random.split(key)
    bound = 1.0 / (c ** 0.5)
    w = jax.random.uniform(kw, (c, c), jnp.float32, -bound, bound)
    b = jax.random.uniform(kb, (1, c), jnp.float32, -bound, bound)
    return w, b


if __name__ == "__main__":
    B, C, Hs, Ws, nhead, Mkv = 2, 32, 8, 8, 4, 16

    key = jax.random.PRNGKey(0)
    kq, kk, kv_key, ko, kx, kkv = jax.random.split(key, 6)
    params = (*init_linear(kq, C), *init_linear(kk, C),
              *init_linear(kv_key, C), *init_linear(ko, C))

    x = jax.random.normal(kx, (B, C, Hs, Ws), jnp.float32)
    kv = jax.random.normal(kkv, (B, Mkv, C), jnp.float32)

    # Small tiles so the test exercises multi-step grids (Q tiles, KV tiles,
    # row tiles of the linears) and the online-softmax accumulation path.
    out = flash_attention_2d(x, kv, params, nhead, self_attn=True,
                             tq=32, tk=16, tm=64)
    out = jax.block_until_ready(out)

    ref = reference(x, kv, params, nhead, self_attn=True)
    assert out.shape == x.shape, (out.shape, x.shape)
    assert jnp.allclose(out, ref, rtol=2e-3, atol=2e-3), float(
        jnp.max(jnp.abs(out - ref)))

    # bf16 MXU-input path (v6e/v7x optimization), f32 accumulation & softmax.
    out_bf16 = flash_attention_2d(x, kv, params, nhead, self_attn=True,
                                  tq=32, tk=16, tm=64,
                                  compute_dtype=jnp.bfloat16)
    out_bf16 = jax.block_until_ready(out_bf16)
    assert jnp.allclose(out_bf16, ref, rtol=1e-1, atol=1e-1), float(
        jnp.max(jnp.abs(out_bf16 - ref)))

    print("KERNEL_OK")
</pallas_src>

<mosaic_0001>
module attributes {stable_mosaic.version = 11 : i64} {
  func.func @_linear_kernel(%arg0: i32, %arg1: memref<64x32xf32, #tpu.memory_space<vmem>>, %arg2: memref<32x32xf32, #tpu.memory_space<vmem>>, %arg3: memref<1x32xf32, #tpu.memory_space<vmem>>, %arg4: memref<64x32xf32, #tpu.memory_space<vmem>>) attributes {dimension_semantics = [#tpu.dimension_semantics<parallel>], iteration_bounds = array<i64: 2>, scalar_prefetch = 0 : i64, scratch_operands = 0 : i64, tpu.core_type = #tpu.core_type<tc>, window_params = [{transform_indices = @transform_0, window_bounds = array<i64: 64, 32>}, {pipeline_mode = #tpu.pipeline_mode<synchronous>, transform_indices = @transform_1, window_bounds = array<i64: 32, 32>}, {pipeline_mode = #tpu.pipeline_mode<synchronous>, transform_indices = @transform_2, window_bounds = array<i64: 1, 32>}, {transform_indices = @transform_3, window_bounds = array<i64: 64, 32>}]} {
    %c0 = arith.constant 0 : index
    %c0_0 = arith.constant 0 : index
    %0 = vector.load %arg1[%c0, %c0_0] : memref<64x32xf32, #tpu.memory_space<vmem>>, vector<64x32xf32>
    %c0_1 = arith.constant 0 : index
    %c0_2 = arith.constant 0 : index
    %1 = vector.load %arg2[%c0_1, %c0_2] : memref<32x32xf32, #tpu.memory_space<vmem>>, vector<32x32xf32>
    %cst = arith.constant dense<0.000000e+00> : vector<64x32xf32>
    %2 = tpu.matmul %0, %1, %cst {dimension_numbers = #tpu.dot_dimension_numbers<[1], [0], [0], [1], [0, 0, 1, 1], [], []>} : vector<64x32xf32>, vector<32x32xf32>, vector<64x32xf32> -> vector<64x32xf32>
    %c0_3 = arith.constant 0 : index
    %c0_4 = arith.constant 0 : index
    %3 = vector.load %arg3[%c0_3, %c0_4] : memref<1x32xf32, #tpu.memory_space<vmem>>, vector<1x32xf32>
    %4 = vector.broadcast %3 : vector<1x32xf32> to vector<64x32xf32>
    %5 = arith.addf %2, %4 : vector<64x32xf32>
    %c0_5 = arith.constant 0 : index
    %c0_6 = arith.constant 0 : index
    %6 = vector.load %arg4[%c0_5, %c0_6] : memref<64x32xf32, #tpu.memory_space<vmem>>, vector<64x32xf32>
    tpu.vector_store %arg4[%c0_5, %c0_6], %5 {strides = array<i32>} : memref<64x32xf32, #tpu.memory_space<vmem>>, vector<64x32xf32>,
    return
  }
  func.func @transform_0(%arg0: i32) -> (i32, i32) {
    %c0_i32 = arith.constant 0 : i32
    %c0_i32_0 = arith.constant 0 : i32
    return %arg0, %c0_i32 : i32, i32
  }
  func.func @transform_1(%arg0: i32) -> (i32, i32) {
    %c0_i32 = arith.constant 0 : i32
    %c0_i32_0 = arith.constant 0 : i32
    %c0_i32_1 = arith.constant 0 : i32
    return %c0_i32, %c0_i32_0 : i32, i32
  }
  func.func @transform_2(%arg0: i32) -> (i32, i32) {
    %c0_i32 = arith.constant 0 : i32
    %c0_i32_0 = arith.constant 0 : i32
    %c0_i32_1 = arith.constant 0 : i32
    return %c0_i32, %c0_i32_0 : i32, i32
  }
  func.func @transform_3(%arg0: i32) -> (i32, i32) {
    %c0_i32 = arith.constant 0 : i32
    %c0_i32_0 = arith.constant 0 : i32
    return %arg0, %c0_i32 : i32, i32
  }
}

</mosaic_0001>

<llo_original>
// kernel: tpu_custom_call.1
$region0: #{tpu_custom_call.1}
  #allocation0 [shape = 'u32[]', space=smem, size = 0x4, offset = 0x4, fixed_abs, tag = 'smem constant byte address 0x4 - core index']
  #allocation1 [shape = 'u32[144,128]{1,0:T(1,128)}', space=vmem, size = 0x12000, scoped, tag = 'internal scratch']
  %s0 = inlined_call_operand.vmem [shape: f32[128,32], index: 0, kind: input, shape index: {}]
  %s1 = inlined_call_operand.vmem [shape: f32[32,32], index: 1, kind: input, shape index: {}]
  %s2 = inlined_call_operand.vmem [shape: f32[1,32], index: 2, kind: input, shape index: {}]
  %s3 = inlined_call_operand.vmem [shape: f32[128,32], index: 3, kind: output, shape index: {}]
  %s4 = sld [smem:[#allocation0]]
  $region45: #{tpu_custom_call.1} parent=0
    _
  %s6 = ssub.s32 1, %s4
  %s7 = scalar_select 0, %s6, %s4
  loop: start=0, step=1, limit=4
  $region2: #{tpu_custom_call.1} parent=0 // loop_pre_header
    _
  $region3: #{tpu_custom_call.1} parent=0 // loop_header
    %s9 = sphi 0, %s13
    %p10 = scmp.ge.s32.totalorder %s9, 4
    %s19 = sphi 0, %s21
    %s22 = sphi 0, %s19
    %s23 = sphi 0, %s22
    %s39 = sphi 0, %s23
    %s43 = sphi 0, %s43
    %s45 = sphi 0, %s43
    %s46 = sphi 0, %s45
    %s60 = sphi 0, %s46
    %s64 = sphi 0, %s64
    %s66 = sphi 0, %s64
    %s67 = sphi 0, %s66
    %s81 = sphi 0, %s67
    %s87 = sphi 0, %s89
    %s90 = sphi 0, %s87
    %s91 = sphi 0, %s90
    %s107 = sphi 0, %s91
  $region4: #{tpu_custom_call.1} parent=0 // loop_header_branch
    %12 = sbr.rel (%p10) target = $region8
  $region5: #{tpu_custom_call.1} parent=0 // loop_body
    %s14 = ssub.s32 %s9, 1
    %s15 = ssub.s32 %s9, 2
    %s16 = sadd.s32 %s9, 1
    %s17 = ssub.s32 %s9, %s16
    %p18 = scmp.eq.s32.totalorder %s17, 0
    %s20 = sadd.s32 %s19, 1
    %s21 = scalar_select %p18, %s19, %s20
    %p24 = pneg %p18
    %p25 = scmp.eq.s32.totalorder %s9, 1
    %p26 = por %p24, %p25
    %p27 = scmp.ne.s32.totalorder %s19, %s22
    %p28 = scmp.eq.s32.totalorder %s9, 0
    %p29 = por %p27, %p28
    %p30 = scmp.ne.s32.totalorder %s19, %s22
    %p31 = scmp.eq.s32.totalorder %s14, 1
    %p32 = por %p30, %p31
    %p33 = scmp.ne.s32.totalorder %s22, %s23
    %p34 = scmp.eq.s32.totalorder %s14, 0
    %p35 = por %p33, %p34
    %p36 = scmp.ne.s32.totalorder %s22, %s23
    %p37 = scmp.eq.s32.totalorder %s15, 1
    %p38 = por %p36, %p37
    %p40 = scmp.ne.s32.totalorder %s23, %s39
    %p41 = scmp.eq.s32.totalorder %s15, 0
    %p42 = por %p40, %p41
    %s44 = sadd.s32 %s43, 1
    %p47 = scmp.eq.s32.totalorder %s9, 1
    %p48 = scmp.ne.s32.totalorder %s43, %s45
    %p49 = scmp.eq.s32.totalorder %s9, 0
    %p50 = por %p48, %p49
    %p51 = scmp.ne.s32.totalorder %s43, %s45
    %p52 = scmp.eq.s32.totalorder %s14, 1
    %p53 = por %p51, %p52
    %p54 = scmp.ne.s32.totalorder %s45, %s46
    %p55 = scmp.eq.s32.totalorder %s14, 0
    %p56 = por %p54, %p55
    %p57 = scmp.ne.s32.totalorder %s45, %s46
    %p58 = scmp.eq.s32.totalorder %s15, 1
    %p59 = por %p57, %p58
    %p61 = scmp.ne.s32.totalorder %s46, %s60
    %p62 = scmp.eq.s32.totalorder %s15, 0
    %p63 = por %p61, %p62
    %s65 = sadd.s32 %s64, 1
    %p68 = scmp.eq.s32.totalorder %s9, 1
    %p69 = scmp.ne.s32.totalorder %s64, %s66
    %p70 = scmp.eq.s32.totalorder %s9, 0
    %p71 = por %p69, %p70
    %p72 = scmp.ne.s32.totalorder %s64, %s66
    %p73 = scmp.eq.s32.totalorder %s14, 1
    %p74 = por %p72, %p73
    %p75 = scmp.ne.s32.totalorder %s66, %s67
    %p76 = scmp.eq.s32.totalorder %s14, 0
    %p77 = por %p75, %p76
    %p78 = scmp.ne.s32.totalorder %s66, %s67
    %p79 = scmp.eq.s32.totalorder %s15, 1
    %p80 = por %p78, %p79
    %p82 = scmp.ne.s32.totalorder %s67, %s81
    %p83 = scmp.eq.s32.totalorder %s15, 0
    %p84 = por %p82, %p83
    %s85 = ssub.s32 %s9, %s16
    %p86 = scmp.eq.s32.totalorder %s85, 0
    %s88 = sadd.s32 %s87, 1
    %s89 = scalar_select %p86, %s87, %s88
    %p92 = pneg %p86
    %p93 = scmp.eq.s32.totalorder %s9, 1
    %p94 = por %p92, %p93
    %p95 = scmp.ne.s32.totalorder %s87, %s90
    %p96 = scmp.eq.s32.totalorder %s9, 0
    %p97 = por %p95, %p96
    %p98 = scmp.ne.s32.totalorder %s87, %s90
    %p99 = scmp.eq.s32.totalorder %s14, 1
    %p100 = por %p98, %p99
    %p101 = scmp.ne.s32.totalorder %s90, %s91
    %p102 = scmp.eq.s32.totalorder %s14, 0
    %p103 = por %p101, %p102
    %p104 = scmp.ne.s32.totalorder %s90, %s91
    %p105 = scmp.eq.s32.totalorder %s15, 1
    %p106 = por %p104, %p105
    %p108 = scmp.ne.s32.totalorder %s91, %s107
    %p109 = scmp.eq.s32.totalorder %s15, 0
    %p110 = por %p108, %p109
    %p111 = scmp.le.s32.totalorder 1, %s9
    %p112 = scmp.lt.s32.totalorder %s9, 3
    %p113 = pnand %p111, %p112
    %p114 = pneg %p113
    // Predicated region
    $region9: #{tpu_custom_call.1} parent=5 // pred_check
      _
    $region10: #{tpu_custom_call.1} parent=5 // pred_check_branch
      %116 = sbr.rel (%p113) target = $region12
    $region11: #{tpu_custom_call.1} parent=5 // pred_region
      %s117 = ssub.s32 %s9, 1
      // Predicated region
      $region13: #{tpu_custom_call.1} parent=11 // pred_check
        %p118 = pneg %p56
      $region14: #{tpu_custom_call.1} parent=11 // pred_check_branch
        %120 = sbr.rel (%p118) target = $region16
      $region15: #{tpu_custom_call.1} parent=11 // pred_region
        _
      $region16: #{tpu_custom_call.1} parent=11 // pred_fallthru
        _
      // Predicated region
      $region17: #{tpu_custom_call.1} parent=11 // pred_check
        %p121 = pneg %p77
      $region18: #{tpu_custom_call.1} parent=11 // pred_check_branch
        %123 = sbr.rel (%p121) target = $region20
      $region19: #{tpu_custom_call.1} parent=11 // pred_region
        _
      $region20: #{tpu_custom_call.1} parent=11 // pred_fallthru
        _
    $region12: #{tpu_custom_call.1} parent=5 // pred_fallthru
      _
    %p124 = scmp.lt.s32.totalorder %s9, 2
    // Predicated region
    $region21: #{tpu_custom_call.1} parent=5 // pred_check
      %p125 = pneg %p124
    $region22: #{tpu_custom_call.1} parent=5 // pred_check_branch
      %127 = sbr.rel (%p125) target = $region24
    $region23: #{tpu_custom_call.1} parent=5 // pred_region
      // Predicated region
      $region25: #{tpu_custom_call.1} parent=23 // pred_check
        %p128 = pneg %p29
      $region26: #{tpu_custom_call.1} parent=23 // pred_check_branch
        %130 = sbr.rel (%p128) target = $region28
      $region27: #{tpu_custom_call.1} parent=23 // pred_region
        %s131 = smul.u32 8, %s9
        %p132 = scmp.lt.s32.totalorder %s131, 15
        %s133 = scalar_select %p132, %s131, 15
        %s134 = smul.addr %s133, 8
        %s135 = scalar_lea.vmem %s0, %s134
        %s136 = smul.u32 8, %s9
      $region28: #{tpu_custom_call.1} parent=23 // pred_fallthru
        _
    $region24: #{tpu_custom_call.1} parent=5 // pred_fallthru
      _
    %p137 = scmp.le.s32.totalorder 1, %s9
    %p138 = scmp.lt.s32.totalorder %s9, 3
    %p139 = pnand %p137, %p138
    %p140 = pneg %p139
    // Predicated region
    $region29: #{tpu_custom_call.1} parent=5 // pred_check
      _
    $region30: #{tpu_custom_call.1} parent=5 // pred_check_branch
      %142 = sbr.rel (%p139) target = $region32
    $region31: #{tpu_custom_call.1} parent=5 // pred_region
      %s143 = ssub.s32 %s9, 1
      %s144 = smul.u32 8, %s14
      %p145 = scmp.lt.s32.totalorder %s144, 15
      %s146 = scalar_select %p145, %s144, 15
      %s147 = smul.addr %s146, 8
      %s148 = scalar_lea.vmem %s0, %s147
      %p149 = pneg %p35
      %p150 = pneg %p32
      %p151 = pneg %p56
      %p152 = pneg %p53
      %p153 = pneg %p77
      %p154 = pneg %p74
      %p155 = pneg %p103
      %p156 = pneg %p100
      %s157 = smul.u32 8, %s14
      %p158 = scmp.lt.s32.totalorder %s157, 15
      %s159 = scalar_select %p158, %s157, 15
      %s160 = smul.addr %s159, 8
      %s161 = scalar_lea.vmem %s3, %s160
      %s162 = smul.u32 8, %s14
      %p163 = scmp.lt.s32.totalorder %s162, 15
      %s164 = scalar_select %p163, %s162, 15
      %s165 = smul.addr %s164, 8
      %s166 = scalar_lea.vmem %s0, %s165
      %s167 = smul.u32 8, %s14
      %s168 = smul.u32 8, %s14
      %p169 = scmp.lt.s32.totalorder %s168, 15
      %s170 = scalar_select %p169, %s168, 15
      %s171 = smul.addr %s170, 8
      %s172 = scalar_lea.vmem %s3, %s171
      %s173 = smul.u32 8, %s14
      %v174 = vld [vmem:[%s166] sm:$0xff]
      %v175 = vld [vmem:[%s166 + $0x8] sm:$0xff]
      %v176 = vld [vmem:[%s166 + $0x10] sm:$0xff]
      %v177 = vld [vmem:[%s166 + $0x18] sm:$0xff]
      %v178 = vld [vmem:[%s166 + $0x20] sm:$0xff]
      %v179 = vld [vmem:[%s166 + $0x28] sm:$0xff]
      %v180 = vld [vmem:[%s166 + $0x30] sm:$0xff]
      %v181 = vld [vmem:[%s166 + $0x38] sm:$0xff]
      %v182 = vld [vmem:[%s1] sm:$0xff]
      %v183 = vld [vmem:[%s1 + $0x8] sm:$0xff]
      %v184 = vld [vmem:[%s1 + $0x10] sm:$0xff]
      %v185 = vld [vmem:[%s1 + $0x18] sm:$0xff]
      %v186 = vld [vmem:[%s2] sm:$0x1]
      %v188 = vlaneseq
      %v189 = vshrl.u32 %v188, 7
      %v190 = vsub.s32 0, %v189
      %v191 = vrot.slane %v186, %v190
      %vm193 = vcmask 261120
      %v195 = vsel %vm193, %v174, 0
      %v198 = vsel %vm193, %v175, 0
      %v201 = vsel %vm193, %v176, 0
      %v204 = vsel %vm193, %v177, 0
      %v207 = vsel %vm193, %v178, 0
      %v210 = vsel %vm193, %v179, 0
      %v213 = vsel %vm193, %v180, 0
      %v216 = vsel %vm193, %v181, 0
      %218 = vmatprep.subr.mxu0 0.0
      %219 = vmatpush1.msra.mxu0 %v182
      %220 = vmatprep.subr.mxu0 0.0
      %221 = vmatpush1.msra.mxu0 %v183
      %222 = vmatprep.subr.mxu0 0.0
      %223 = vmatpush1.msra.mxu0 %v184
      %224 = vmatprep.subr.mxu0 0.0
      %225 = vmatpush1.msra.mxu0 %v185
      %226 = vmatprep.subr.mxu0 0.0
      %227 = vmatpush1.msra.mxu0 0.0
      %228 = vmatprep.subr.mxu0 0.0
      %229 = vmatpush1.msra.mxu0 0.0
      %230 = vmatprep.subr.mxu0 0.0
      %231 = vmatpush1.msra.mxu0 0.0
      %232 = vmatprep.subr.mxu0 0.0
      %233 = vmatpush1.msra.mxu0 0.0
      %234 = vmatprep.subr.mxu0 0.0
      %235 = vmatpush1.msra.mxu0 0.0
      %236 = vmatprep.subr.mxu0 0.0
      %237 = vmatpush1.msra.mxu0 0.0
      %238 = vmatprep.subr.mxu0 0.0
      %239 = vmatpush1.msra.mxu0 0.0
      %240 = vmatprep.subr.mxu0 0.0
      %241 = vmatpush1.msra.mxu0 0.0
      %242 = vmatprep.subr.mxu0 0.0
      %243 = vmatpush1.msra.mxu0 0.0
      %244 = vmatprep.subr.mxu0 0.0
      %245 = vmatpush1.msra.mxu0 0.0
      %246 = vmatprep.subr.mxu0 0.0
      %247 = vmatpush1.msra.mxu0 0.0
      %248 = vmatprep.subr.mxu0 0.0
      %249 = vmatpush1.msra.mxu0 0.0
      %250 = vmatprep.subr.mxu0 0.0
      %251 = vmatpush1.msra.mxu0 0.0
      %252 = vmatprep.subr.mxu0 0.0
      %253 = vmatpush1.msra.mxu0 0.0
      %254 = vmatprep.subr.mxu0 0.0
      %255 = vmatpush1.msra.mxu0 0.0
      %256 = vmatprep.subr.mxu0 0.0
      %257 = vmatpush1.msra.mxu0 0.0
      %258 = vmatprep.subr.mxu0 0.0
      %259 = vmatpush1.msra.mxu0 0.0
      %260 = vmatprep.subr.mxu0 0.0
      %261 = vmatpush1.msra.mxu0 0.0
      %262 = vmatprep.subr.mxu0 0.0
      %263 = vmatpush1.msra.mxu0 0.0
      %264 = vmatprep.subr.mxu0 0.0
      %265 = vmatpush1.msra.mxu0 0.0
      %266 = vmatprep.subr.mxu0 0.0
      %267 = vmatpush1.msra.mxu0 0.0
      %268 = vmatprep.subr.mxu0 0.0
      %269 = vmatpush1.msra.mxu0 0.0
      %270 = vmatprep.subr.mxu0 0.0
      %271 = vmatpush1.msra.mxu0 0.0
      %272 = vmatprep.subr.mxu0 0.0
      %273 = vmatpush1.msra.mxu0 0.0
      %274 = vmatprep.subr.mxu0 0.0
      %275 = vmatpush1.msra.mxu0 0.0
      %276 = vmatprep.subr.mxu0 0.0
      %277 = vmatpush1.msra.mxu0 0.0
      %278 = vmatprep.subr.mxu0 0.0
      %279 = vmatpush1.msra.mxu0 0.0
      %280 = vmatprep.subr.mxu0 0.0
      %281 = vmatpush1.msra.mxu0 0.0
      %282 = vmatprep.mubr.f32.mxu0 0.0
      %283 = vmatmul.mubr.f32.gmra.mrb[0].mxu0 %v195
      %v284 = vpop.f32.mrb[0].mxu0
      %v285 = vadd.f32 %v191, %v284
      %v286 = vpop.f32.mrb[0].mxu0
      %287 = vmatprep.mubr.f32.mxu0 0.0
      %288 = vmatmul.mubr.f32.gmra.mrb[0].mxu0 %v198
      %v289 = vpop.f32.mrb[0].mxu0
      %v290 = vadd.f32 %v191, %v289
      %v291 = vpop.f32.mrb[0].mxu0
      %292 = vmatprep.mubr.f32.mxu0 0.0
      %293 = vmatmul.mubr.f32.gmra.mrb[0].mxu0 %v201
      %v294 = vpop.f32.mrb[0].mxu0
      %v295 = vadd.f32 %v191, %v294
      %v296 = vpop.f32.mrb[0].mxu0
      %297 = vmatprep.mubr.f32.mxu0 0.0
      %298 = vmatmul.mubr.f32.gmra.mrb[0].mxu0 %v204
      %v299 = vpop.f32.mrb[0].mxu0
      %v300 = vadd.f32 %v191, %v299
      %v301 = vpop.f32.mrb[0].mxu0
      %302 = vmatprep.mubr.f32.mxu0 0.0
      %303 = vmatmul.mubr.f32.gmra.mrb[0].mxu0 %v207
      %v304 = vpop.f32.mrb[0].mxu0
      %v305 = vadd.f32 %v191, %v304
      %v306 = vpop.f32.mrb[0].mxu0
      %307 = vmatprep.mubr.f32.mxu0 0.0
      %308 = vmatmul.mubr.f32.gmra.mrb[0].mxu0 %v210
      %v309 = vpop.f32.mrb[0].mxu0
      %v310 = vadd.f32 %v191, %v309
      %v311 = vpop.f32.mrb[0].mxu0
      %312 = vmatprep.mubr.f32.mxu0 0.0
      %313 = vmatmul.mubr.f32.gmra.mrb[0].mxu0 %v213
      %v314 = vpop.f32.mrb[0].mxu0
      %v315 = vadd.f32 %v191, %v314
      %v316 = vpop.f32.mrb[0].mxu0
      %317 = vmatprep.mubr.f32.mxu0 0.0
      %318 = vmatmul.mubr.f32.gmra.mrb[0].mxu0 %v216
      %v319 = vpop.f32.mrb[0].mxu0
      %v320 = vadd.f32 %v191, %v319
      %v321 = vpop.f32.mrb[0].mxu0
      %322 = vdwg.mxu0
      %323 = vst.msk [vmem:[%s172] sm:$0xff] %vm193, %v285
      %324 = vst.msk [vmem:[%s172 + $0x8] sm:$0xff] %vm193, %v290
      %325 = vst.msk [vmem:[%s172 + $0x10] sm:$0xff] %vm193, %v295
      %326 = vst.msk [vmem:[%s172 + $0x18] sm:$0xff] %vm193, %v300
      %327 = vst.msk [vmem:[%s172 + $0x20] sm:$0xff] %vm193, %v305
      %328 = vst.msk [vmem:[%s172 + $0x28] sm:$0xff] %vm193, %v310
      %329 = vst.msk [vmem:[%s172 + $0x30] sm:$0xff] %vm193, %v315
      %330 = vst.msk [vmem:[%s172 + $0x38] sm:$0xff] %vm193, %v320
      %s331 = smul.u32 8, %s14
      %p332 = scmp.lt.s32.totalorder %s331, 15
      %s333 = scalar_select %p332, %s331, 15
      %s334 = smul.addr %s333, 8
      %s335 = scalar_lea.vmem %s3, %s334
      // Predicated region
      $region33: #{tpu_custom_call.1} parent=31 // pred_check
        %p336 = pneg %p100
      $region34: #{tpu_custom_call.1} parent=31 // pred_check_branch
        %338 = sbr.rel (%p336) target = $region36
      $region35: #{tpu_custom_call.1} parent=31 // pred_region
        %s339 = smul.u32 8, %s14
      $region36: #{tpu_custom_call.1} parent=31 // pred_fallthru
        _
    $region32: #{tpu_custom_call.1} parent=5 // pred_fallthru
      _
    %p340 = scmp.le.s32.totalorder 2, %s9
    // Predicated region
    $region37: #{tpu_custom_call.1} parent=5 // pred_check
      %p341 = pneg %p340
    $region38: #{tpu_custom_call.1} parent=5 // pred_check_branch
      %343 = sbr.rel (%p341) target = $region40
    $region39: #{tpu_custom_call.1} parent=5 // pred_region
      %s344 = ssub.s32 %s9, 2
      // Predicated region
      $region41: #{tpu_custom_call.1} parent=39 // pred_check
        %p345 = pneg %p106
      $region42: #{tpu_custom_call.1} parent=39 // pred_check_branch
        %347 = sbr.rel (%p345) target = $region44
      $region43: #{tpu_custom_call.1} parent=39 // pred_region
        %s348 = smul.u32 8, %s15
        %p349 = scmp.lt.s32.totalorder %s348, 15
        %s350 = scalar_select %p349, %s348, 15
        %s351 = smul.addr %s350, 8
        %s352 = scalar_lea.vmem %s3, %s351
      $region44: #{tpu_custom_call.1} parent=39 // pred_fallthru
        _
    $region40: #{tpu_custom_call.1} parent=5 // pred_fallthru
      _
  $region6: #{tpu_custom_call.1} parent=0 // loop_footer
    %s13 = sadd.s32 1, %s9
  $region7: #{tpu_custom_call.1} parent=0 // loop_footer_branch
    %8 = sbr.rel target = $region3
  $region8: #{tpu_custom_call.1} parent=0 // loop_exit
    _

</llo_original>
